<compile_context>
chip_gen: v6e
topology: v6e:2x2x1
jax: 0.10.0
libtpu: 0.0.40
codegen_flags: <defaults>
</compile_context>

<pallas_src>
import functools
import math

import jax
import jax.numpy as jnp
from jax.experimental import pallas as pl
from jax.experimental.pallas import tpu as pltpu

_LANES = 128


# --------------------------------------------------------------------------
# Kernel
# --------------------------------------------------------------------------
def _lane_dense_kernel(score_ref, o_ref, *, repeats):
    """score_ref: (1, L) f32 = the (A,) score tiled L//A times (L = lcm(A,128)).
    o_ref: (tile_rows, L) f32; every row is tile(softmax(score), repeats)."""
    s = score_ref[...]                                  # (1, L)
    m = jnp.max(s, axis=-1, keepdims=True)              # XLU reduce (== max over A)
    e = jnp.exp(s - m)                                  # EUP
    denom = jnp.sum(e, axis=-1, keepdims=True)          # = repeats * true denom
    p = e * (jnp.float32(repeats) / denom)              # exact divide + exact rescale
    # Sublane-broadcast splat store: one full-lane vreg row replicated down the
    # tile; lowers to unmasked vst (no (tr, L) VMEM temp expected).
    o_ref[...] = jnp.broadcast_to(p, o_ref.shape)


# --------------------------------------------------------------------------
# Wrapper
# --------------------------------------------------------------------------
def _forward_lane_dense(score, B, A, block_bytes):
    L = (A * _LANES) // math.gcd(A, _LANES)             # lcm(A, 128); multiple of 128
    repeats = L // A
    total = B * A
    rows = pl.cdiv(total, L)                            # lane-dense rows needed

    # Row-tile sized by bytes (multiple of 8 sublanes).  Default 4 MiB block ->
    # 8 MiB double-buffered output: fits v5e's 16 MiB default scoped VMEM and
    # amortizes per-step overhead on v6e/v7x.
    tr_max = (block_bytes // (L * 4)) // 8 * 8
    tr_max = max(tr_max, 8)
    if rows <= tr_max:
        tr = rows                                       # single block == full array
    else:
        tr = tr_max                                     # multiple of 8; last block
    n_tiles = pl.cdiv(rows, tr)                         # may be partial (Pallas masks)

    # Layout plumbing: tile the score across one full L-lane row.
    score_tiled = jnp.tile(score.astype(jnp.float32).reshape(1, A), (1, repeats))

    out = pl.pallas_call(
        functools.partial(_lane_dense_kernel, repeats=repeats),
        out_shape=jax.ShapeDtypeStruct((rows, L), jnp.float32),
        grid=(n_tiles,),
        in_specs=[pl.BlockSpec((1, L), lambda i: (0, 0))],
        out_specs=pl.BlockSpec((tr, L), lambda i: (i, 0)),
        compiler_params=pltpu.CompilerParams(
            dimension_semantics=("parallel",)),          # v7x: shard tiles over 2 TCs
        cost_estimate=pl.CostEstimate(
            flops=0, transcendentals=L, bytes_accessed=rows * L * 4),
    )(score_tiled)

    # Free row-major bitcast: (rows, L) -> (rows*repeats, A).
    out = out.reshape(rows * repeats, A)
    if rows * repeats == B:                              # B*A % L == 0: no slice at all
        return out
    return out[:B]                                       # zero-offset leading-dim slice


def naive_policy_forward(X, score, *, block_bytes=4 << 20, force_pallas=False,
                         min_pallas_elements=1 << 16):
    """softmax(score) broadcast over the batch dimension of X (only X.shape[0] is used)."""
    B = X.shape[0]
    A = score.shape[0]

    if not force_pallas and B * A < min_pallas_elements:
        # Tiny problem: pallas_call launch overhead dominates; let XLA fuse it.
        return jnp.broadcast_to(jax.nn.softmax(score.astype(jnp.float32))[None, :], (B, A))

    return _forward_lane_dense(score, B, A, block_bytes)


# --------------------------------------------------------------------------
# Test
# --------------------------------------------------------------------------
if __name__ == "__main__":
    key = jax.random.PRNGKey(0)
    batch, features, n_actions = 2, 4, 8

    X = jax.random.normal(key, (batch, features), dtype=jnp.float32)
    # NaivePolicy.__init__ uses torch.ones(n_actions).
    score = jnp.ones((n_actions,), dtype=jnp.float32)

    out = naive_policy_forward(X, score, force_pallas=True)
    out = jax.block_until_ready(out)
    ref = jnp.broadcast_to(jax.nn.softmax(score)[None, :], (batch, n_actions))
    assert out.shape == (batch, n_actions)
    assert jnp.allclose(out, ref, atol=1e-5, rtol=1e-5), (out, ref)

    # Multi-tile lane-dense path (small block to exercise grid > 1) with random scores.
    k1, k2 = jax.random.split(key)
    B2, A2 = 4096, 8
    X2 = jax.random.normal(k1, (B2, features), dtype=jnp.float32)
    score2 = jax.random.normal(k2, (A2,), dtype=jnp.float32)
    out2 = jax.block_until_ready(
        naive_policy_forward(X2, score2, block_bytes=64 * _LANES * 4,
                             force_pallas=True))                       # tr = 64 rows
    ref2 = jnp.broadcast_to(jax.nn.softmax(score2)[None, :], (B2, A2))
    assert out2.shape == (B2, A2)
    assert jnp.allclose(out2, ref2, atol=1e-5, rtol=1e-5)

    # n_actions that does not divide 128 -> lcm(6,128)=384-wide lane-dense path.
    B3, A3 = 16, 6
    X3 = jax.random.normal(k1, (B3, features), dtype=jnp.float32)
    score3 = jax.random.normal(k2, (A3,), dtype=jnp.float32)
    out3 = jax.block_until_ready(naive_policy_forward(X3, score3, force_pallas=True))
    ref3 = jnp.broadcast_to(jax.nn.softmax(score3)[None, :], (B3, A3))
    assert out3.shape == (B3, A3)
    assert jnp.allclose(out3, ref3, atol=1e-5, rtol=1e-5)

    # TODO(synk): get_actions()/vectorized() use host-side numpy RNG categorical
    # sampling and are intentionally not ported to Pallas (not part of forward()).
    print("KERNEL_OK")
</pallas_src>

<mosaic_0001>
module attributes {stable_mosaic.version = 11 : i64} {
  func.func @_lane_dense_kernel(%arg0: i32, %arg1: memref<1x128xf32, #tpu.memory_space<vmem>>, %arg2: memref<1x128xf32, #tpu.memory_space<vmem>>) attributes {dimension_semantics = [#tpu.dimension_semantics<parallel>], iteration_bounds = array<i64: 1>, scalar_prefetch = 0 : i64, scratch_operands = 0 : i64, tpu.core_type = #tpu.core_type<tc>, window_params = [{pipeline_mode = #tpu.pipeline_mode<synchronous>, transform_indices = @transform_0, window_bounds = array<i64: 1, 128>}, {transform_indices = @transform_1, window_bounds = array<i64: 1, 128>}]} {
    %c0 = arith.constant 0 : index
    %c0_0 = arith.constant 0 : index
    %0 = vector.load %arg1[%c0, %c0_0] : memref<1x128xf32, #tpu.memory_space<vmem>>, vector<1x128xf32>
    %cst = arith.constant dense<0xFF800000> : vector<1xf32>
    %1 = vector.multi_reduction <maximumf>, %0, %cst [1] : vector<1x128xf32> to vector<1xf32>
    %2 = vector.shape_cast %1 : vector<1xf32> to vector<1x1xf32>
    %3 = vector.broadcast %2 : vector<1x1xf32> to vector<1x128xf32>
    %4 = arith.subf %0, %3 : vector<1x128xf32>
    %5 = math.exp %4 : vector<1x128xf32>
    %cst_1 = arith.constant dense<0.000000e+00> : vector<1xf32>
    %6 = vector.multi_reduction <add>, %5, %cst_1 [1] : vector<1x128xf32> to vector<1xf32>
    %7 = vector.shape_cast %6 : vector<1xf32> to vector<1x1xf32>
    %cst_2 = arith.constant 1.600000e+01 : f32
    %8 = vector.broadcast %cst_2 : f32 to vector<1x1xf32>
    %9 = arith.divf %8, %7 : vector<1x1xf32>
    %10 = vector.broadcast %9 : vector<1x1xf32> to vector<1x128xf32>
    %11 = arith.mulf %5, %10 : vector<1x128xf32>
    %c0_3 = arith.constant 0 : index
    %c0_4 = arith.constant 0 : index
    %12 = vector.load %arg2[%c0_3, %c0_4] : memref<1x128xf32, #tpu.memory_space<vmem>>, vector<1x128xf32>
    tpu.vector_store %arg2[%c0_3, %c0_4], %11 {strides = array<i32>} : memref<1x128xf32, #tpu.memory_space<vmem>>, vector<1x128xf32>,
    return
  }
  func.func @transform_0(%arg0: i32) -> (i32, i32) {
    %c0_i32 = arith.constant 0 : i32
    %c0_i32_0 = arith.constant 0 : i32
    %c0_i32_1 = arith.constant 0 : i32
    return %c0_i32, %c0_i32_0 : i32, i32
  }
  func.func @transform_1(%arg0: i32) -> (i32, i32) {
    %c0_i32 = arith.constant 0 : i32
    %c0_i32_0 = arith.constant 0 : i32
    return %arg0, %c0_i32 : i32, i32
  }
}

</mosaic_0001>

<llo_original>
// kernel: tpu_custom_call.1
$region0: #{tpu_custom_call.1}
  #allocation0 [shape = 'u32[]', space=smem, size = 0x4, offset = 0x4, fixed_abs, tag = 'smem constant byte address 0x4 - core index']
  #allocation1 [shape = 'u32[144,128]{1,0:T(1,128)}', space=vmem, size = 0x12000, scoped, tag = 'internal scratch']
  %s0 = inlined_call_operand.hbm [shape: f32[1,128], index: 0, kind: input, shape index: {}]
  %s1 = inlined_call_operand.hbm [shape: f32[1,128], index: 1, kind: output, shape index: {}]
  %s2 = sld [smem:[#allocation0]]
  $region18: #{tpu_custom_call.1} parent=0
    _
  %s4 = ssub.s32 1, %s2
  %s5 = scalar_select 0, %s4, %s2
  $region1: #{tpu_custom_call.1} parent=0
    #allocation2 [shape = 'u8[512]{0}', space=vmem, size = 0x400, scoped, tag = 'input window, operand 0, single buffered']
    #allocation3 [shape = 's32[1]{0}', space=sflag, size = 0x4, scoped, tag = 'scoped memory for tpu_custom_call.1']
    #allocation4 [shape = 's32[1]{0}', space=sflag, size = 0x4, scoped, tag = 'scoped memory for tpu_custom_call.1']
    #allocation5 [shape = 'u8[512]{0}', space=vmem, size = 0x400, scoped, tag = 'output window, operand 0, single buffered']
    %6 = vsyncpa [#allocation3], 0
    %7 = vsyncpa [#allocation4], 0
    // Predicated region
    $region2: #{tpu_custom_call.1} parent=1 // pred_check
      _
    $region3: #{tpu_custom_call.1} parent=1 // pred_check_branch
      %9 = sbr.rel (0) target = $region5
    $region4: #{tpu_custom_call.1} parent=1 // pred_region
      %s11 = ssub.s32 16, 16
      %12 = vsyncadd [#allocation3], %s11
      %s14 = sshll.u32 [#allocation2], 4
      %s15 = int_to_ptr.vmem [resolvable:$true] %s14
      %17 = dma.hbm_to_vmem [thread:$0]  %s0, 16, %s15, [#allocation3]
    $region5: #{tpu_custom_call.1} parent=1 // pred_fallthru
      _
    // Predicated region
    $region6: #{tpu_custom_call.1} parent=1 // pred_check
      _
    $region7: #{tpu_custom_call.1} parent=1 // pred_check_branch
      %19 = sbr.rel (0) target = $region9
    $region8: #{tpu_custom_call.1} parent=1 // pred_region
      %20 = dma.done [#allocation3], 16
    $region9: #{tpu_custom_call.1} parent=1 // pred_fallthru
      _
    %v21 = vld [vmem:[#allocation2] sm:$0x1]
    %vm22 = vcmask 1040384
    %v23 = vsel %vm22, %v21, -inf
    %24 = vmax.xlane.f32.xlu0 %v23
    %v25 = vpop.xlane.xlu0 %24
    %v26 = vsub.f32 %v21, %v25
    %v27 = vmul.f32 %v26, 1.442695
    %v28 = vpow.pop %v27
    %v29 = vsel %vm22, %v28, 0.0
    %30 = vadd.xlane.f32.xlu0 %v29
    %v31 = vpop.xlane.xlu0 %30
    %v32 = vrcp.pop %v31
    %v33 = vmul.f32 16.0, %v32
    %v34 = vmul.f32 %v28, %v33
    %35 = vst [vmem:[#allocation5] sm:$0x1] %v34
    // Predicated region
    $region10: #{tpu_custom_call.1} parent=1 // pred_check
      _
    $region11: #{tpu_custom_call.1} parent=1 // pred_check_branch
      %37 = sbr.rel (0) target = $region13
    $region12: #{tpu_custom_call.1} parent=1 // pred_region
      %s39 = ssub.s32 16, 16
      %40 = vsyncadd [#allocation4], %s39
      %s42 = sshll.u32 [#allocation5], 4
      %s43 = int_to_ptr.vmem [resolvable:$true] %s42
      %45 = dma.vmem_to_hbm [thread:$0]  %s43, 16, %s1, [#allocation4]
    $region13: #{tpu_custom_call.1} parent=1 // pred_fallthru
      _
    // Predicated region
    $region14: #{tpu_custom_call.1} parent=1 // pred_check
      _
    $region15: #{tpu_custom_call.1} parent=1 // pred_check_branch
      %47 = sbr.rel (0) target = $region17
    $region16: #{tpu_custom_call.1} parent=1 // pred_region
      %48 = dma.done [#allocation4], 16
    $region17: #{tpu_custom_call.1} parent=1 // pred_fallthru
      _
    %49 = vsyncpa [#allocation3], 1
    %50 = vsyncpa [#allocation4], 1

</llo_original>
